<compile_context>
chip_gen: v6e
topology: v6e:2x2x1
jax: 0.10.0
libtpu: 0.0.40
codegen_flags: <defaults>
</compile_context>

<pallas_src>
import functools

import jax
import jax.numpy as jnp
from jax.experimental import pallas as pl
from jax.experimental.pallas import tpu as pltpu


HEAD_PAD = 128  # lane-dense packed encoder-head width: [mu | log_var | 0-pad]


def _round_up(n, m):
    return ((n + m - 1) // m) * m


# ----------------------------- Pallas kernel -------------------------------

def _linear(x, w_ref, b_ref):
    # MXU matmul in bf16 with f32 accumulation; bias add in f32 on the VPU.
    y = jnp.dot(x.astype(jnp.bfloat16), w_ref[...],
                preferred_element_type=jnp.float32)
    return y + b_ref[...]


def _linear_relu(x, w_ref, b_ref):
    return jnp.maximum(_linear(x, w_ref, b_ref), 0.0)


def vae_kernel(x_ref, eps_ref,
               w1, b1, w2, b2, w3, b3, wh, bh,
               w4, b4, w5, b5, w6, b6, w7, b7,
               recon_ref, head_ref, *, z_dim):
    x = x_ref[...]                                   # [TB, x_dim] f32

    # ----- encoder -----
    h = _linear_relu(x, w1, b1)                      # fc1 + relu
    h = _linear_relu(h, w2, b2)                      # fc2 + relu
    h = _linear_relu(h, w3, b3)                      # fc3 + relu
    head = _linear(h, wh, bh)                        # fused fc31|fc32 (+ pad)
    mu = head[:, :z_dim]
    log_var = head[:, z_dim:2 * z_dim]

    # ----- sampling (reparameterization) -----
    std = jnp.exp(0.5 * log_var)
    z = eps_ref[...] * std + mu

    # ----- decoder -----
    h = _linear_relu(z, w4, b4)                      # fc4 + relu
    h = _linear_relu(h, w5, b5)                      # fc5 + relu
    h = _linear_relu(h, w6, b6)                      # fc6 + relu
    recon_ref[...] = jax.nn.sigmoid(_linear(h, w7, b7))   # fc7 + sigmoid

    # lane-dense (128-wide) packed mu/log_var output; split in the wrapper
    head_ref[...] = head


# ------------------------------- wrapper ------------------------------------

@functools.partial(jax.jit, static_argnames=("img_size",))
def linear_vae_forward(x_nchw, eps, params, *, img_size):
    """Full LinearVAE forward pass inside one batched Pallas call.

    x_nchw : [B, C, H, W] float32 (C*H*W == img_size == x_dim)
    eps    : [B, z_dim]  float32 standard-normal noise
    params : dict of pre-transposed f32 weights ([in, out]) and biases ([1, out])
    Returns (recon_x, mu, log_var) matching the PyTorch module.
    """
    B = x_nchw.shape[0]
    x_flat = x_nchw.reshape(B, img_size).astype(jnp.float32)  # torch .view

    x_dim = params["w1"].shape[0]
    h_dim2 = params["w2"].shape[1]
    z_dim = params["w31"].shape[1]
    assert 2 * z_dim <= HEAD_PAD

    # Fuse fc31/fc32 into one matmul and pad output lanes to 128.
    wh = jnp.concatenate(
        [params["w31"], params["w32"],
         jnp.zeros((h_dim2, HEAD_PAD - 2 * z_dim), jnp.float32)], axis=1)
    bh = jnp.concatenate(
        [params["b31"], params["b32"],
         jnp.zeros((1, HEAD_PAD - 2 * z_dim), jnp.float32)], axis=1)

    def wcast(w):
        return w.astype(jnp.bfloat16)   # bf16 weights, f32 accumulation

    weights = [
        wcast(params["w1"]), params["b1"],
        wcast(params["w2"]), params["b2"],
        wcast(params["w3"]), params["b3"],
        wcast(wh), bh,
        wcast(params["w4"]), params["b4"],
        wcast(params["w5"]), params["b5"],
        wcast(params["w6"]), params["b6"],
        wcast(params["w7"]), params["b7"],
    ]

    # Batch tile: up to 256 rows (fills the MXU M dim on v6e/v7x), always a
    # multiple of 8 (f32 sublane tile).  Pad batch to a multiple of TB.
    TB = min(256, _round_up(B, 8))
    B_pad = _round_up(B, TB)
    if B_pad != B:
        pad = B_pad - B
        x_flat = jnp.pad(x_flat, ((0, pad), (0, 0)))
        eps = jnp.pad(eps, ((0, pad), (0, 0)))
    grid = (pl.cdiv(B_pad, TB),)

    def batch_spec(feat):
        return pl.BlockSpec((TB, feat), lambda i: (i, 0))

    def resident_spec(arr):
        # Constant block index -> weight stays resident in VMEM across steps.
        return pl.BlockSpec(arr.shape, lambda i: (0, 0))

    in_specs = ([batch_spec(x_dim), batch_spec(z_dim)]
                + [resident_spec(w) for w in weights])
    out_specs = (batch_spec(x_dim), batch_spec(HEAD_PAD))
    out_shapes = (
        jax.ShapeDtypeStruct((B_pad, x_dim), jnp.float32),     # recon_x
        jax.ShapeDtypeStruct((B_pad, HEAD_PAD), jnp.float32),  # mu|log_var|pad
    )

    recon, head = pl.pallas_call(
        functools.partial(vae_kernel, z_dim=z_dim),
        grid=grid,
        out_shape=out_shapes,
        in_specs=in_specs,
        out_specs=out_specs,
        compiler_params=pltpu.CompilerParams(
            dimension_semantics=("parallel",)),
    )(x_flat, eps, *weights)

    recon_x = recon[:B]
    mu = head[:B, :z_dim]
    log_var = head[:B, z_dim:2 * z_dim]
    return recon_x, mu, log_var


# -------------------------- deterministic params -----------------------------

def init_linear(key, fan_in, fan_out):
    """PyTorch nn.Linear default init: U(-1/sqrt(fan_in), 1/sqrt(fan_in)).
    Weight is returned pre-transposed as [in, out]; bias as [1, out]."""
    kw, kb = jax.random.split(key)
    bound = 1.0 / jnp.sqrt(jnp.float32(fan_in))
    w = jax.random.uniform(kw, (fan_in, fan_out), jnp.float32, -bound, bound)
    b = jax.random.uniform(kb, (1, fan_out), jnp.float32, -bound, bound)
    return w, b


def make_params(key, x_dim, h_dim1, h_dim2, z_dim):
    names_dims = [
        ("1", x_dim, h_dim1), ("2", h_dim1, h_dim2), ("3", h_dim2, h_dim2),
        ("31", h_dim2, z_dim), ("32", h_dim2, z_dim),
        ("4", z_dim, h_dim2), ("5", h_dim2, h_dim2), ("6", h_dim2, h_dim1),
        ("7", h_dim1, x_dim),
    ]
    keys = jax.random.split(key, len(names_dims))
    params = {}
    for k, (name, fin, fout) in zip(keys, names_dims):
        w, b = init_linear(k, fin, fout)
        params[f"w{name}"] = w
        params[f"b{name}"] = b
    return params


# --------------------------------- main --------------------------------------

if __name__ == "__main__":
    # Small shapes consistent with the module: 1-channel 16x16 images.
    B, C, H, W = 2, 1, 16, 16
    img_size = x_dim = C * H * W          # 256
    h_dim1, h_dim2, z_dim = 128, 64, 32

    root = jax.random.PRNGKey(0)
    k_params, k_x, k_eps = jax.random.split(root, 3)

    params = make_params(k_params, x_dim, h_dim1, h_dim2, z_dim)
    x = jax.random.uniform(k_x, (B, C, H, W), jnp.float32)      # NCHW input
    eps = jax.random.normal(k_eps, (B, z_dim), jnp.float32)     # randn_like(std)

    recon_x, mu, log_var = linear_vae_forward(x, eps, params, img_size=img_size)
    jax.block_until_ready((recon_x, mu, log_var))

    assert recon_x.shape == (B, x_dim)
    assert mu.shape == (B, z_dim)
    assert log_var.shape == (B, z_dim)
    assert bool(jnp.all(recon_x >= 0.0)) and bool(jnp.all(recon_x <= 1.0))
    assert bool(jnp.all(jnp.isfinite(recon_x)))
    assert bool(jnp.all(jnp.isfinite(mu))) and bool(jnp.all(jnp.isfinite(log_var)))

    print("KERNEL_OK")
</pallas_src>

<mosaic_0001>
module attributes {stable_mosaic.version = 11 : i64} {
  func.func @vae_kernel(%arg0: i32, %arg1: memref<8x256xf32, #tpu.memory_space<vmem>>, %arg2: memref<8x32xf32, #tpu.memory_space<vmem>>, %arg3: memref<256x128xbf16, #tpu.memory_space<vmem>>, %arg4: memref<1x128xf32, #tpu.memory_space<vmem>>, %arg5: memref<128x64xbf16, #tpu.memory_space<vmem>>, %arg6: memref<1x64xf32, #tpu.memory_space<vmem>>, %arg7: memref<64x64xbf16, #tpu.memory_space<vmem>>, %arg8: memref<1x64xf32, #tpu.memory_space<vmem>>, %arg9: memref<64x128xbf16, #tpu.memory_space<vmem>>, %arg10: memref<1x128xf32, #tpu.memory_space<vmem>>, %arg11: memref<32x64xbf16, #tpu.memory_space<vmem>>, %arg12: memref<1x64xf32, #tpu.memory_space<vmem>>, %arg13: memref<64x64xbf16, #tpu.memory_space<vmem>>, %arg14: memref<1x64xf32, #tpu.memory_space<vmem>>, %arg15: memref<64x128xbf16, #tpu.memory_space<vmem>>, %arg16: memref<1x128xf32, #tpu.memory_space<vmem>>, %arg17: memref<128x256xbf16, #tpu.memory_space<vmem>>, %arg18: memref<1x256xf32, #tpu.memory_space<vmem>>, %arg19: memref<8x256xf32, #tpu.memory_space<vmem>>, %arg20: memref<8x128xf32, #tpu.memory_space<vmem>>) attributes {dimension_semantics = [#tpu.dimension_semantics<parallel>], iteration_bounds = array<i64: 1>, scalar_prefetch = 0 : i64, scratch_operands = 0 : i64, tpu.core_type = #tpu.core_type<tc>, window_params = [{transform_indices = @transform_0, window_bounds = array<i64: 8, 256>}, {transform_indices = @transform_1, window_bounds = array<i64: 8, 32>}, {pipeline_mode = #tpu.pipeline_mode<synchronous>, transform_indices = @transform_2, window_bounds = array<i64: 256, 128>}, {pipeline_mode = #tpu.pipeline_mode<synchronous>, transform_indices = @transform_3, window_bounds = array<i64: 1, 128>}, {pipeline_mode = #tpu.pipeline_mode<synchronous>, transform_indices = @transform_4, window_bounds = array<i64: 128, 64>}, {pipeline_mode = #tpu.pipeline_mode<synchronous>, transform_indices = @transform_5, window_bounds = array<i64: 1, 64>}, {pipeline_mode = #tpu.pipeline_mode<synchronous>, transform_indices = @transform_6, window_bounds = array<i64: 64, 64>}, {pipeline_mode = #tpu.pipeline_mode<synchronous>, transform_indices = @transform_7, window_bounds = array<i64: 1, 64>}, {pipeline_mode = #tpu.pipeline_mode<synchronous>, transform_indices = @transform_8, window_bounds = array<i64: 64, 128>}, {pipeline_mode = #tpu.pipeline_mode<synchronous>, transform_indices = @transform_9, window_bounds = array<i64: 1, 128>}, {pipeline_mode = #tpu.pipeline_mode<synchronous>, transform_indices = @transform_10, window_bounds = array<i64: 32, 64>}, {pipeline_mode = #tpu.pipeline_mode<synchronous>, transform_indices = @transform_11, window_bounds = array<i64: 1, 64>}, {pipeline_mode = #tpu.pipeline_mode<synchronous>, transform_indices = @transform_12, window_bounds = array<i64: 64, 64>}, {pipeline_mode = #tpu.pipeline_mode<synchronous>, transform_indices = @transform_13, window_bounds = array<i64: 1, 64>}, {pipeline_mode = #tpu.pipeline_mode<synchronous>, transform_indices = @transform_14, window_bounds = array<i64: 64, 128>}, {pipeline_mode = #tpu.pipeline_mode<synchronous>, transform_indices = @transform_15, window_bounds = array<i64: 1, 128>}, {pipeline_mode = #tpu.pipeline_mode<synchronous>, transform_indices = @transform_16, window_bounds = array<i64: 128, 256>}, {pipeline_mode = #tpu.pipeline_mode<synchronous>, transform_indices = @transform_17, window_bounds = array<i64: 1, 256>}, {transform_indices = @transform_18, window_bounds = array<i64: 8, 256>}, {transform_indices = @transform_19, window_bounds = array<i64: 8, 128>}]} {
    %c0 = arith.constant 0 : index
    %c0_0 = arith.constant 0 : index
    %0 = vector.load %arg1[%c0, %c0_0] : memref<8x256xf32, #tpu.memory_space<vmem>>, vector<8x256xf32>
    %1 = arith.truncf %0 : vector<8x256xf32> to vector<8x256xbf16>
    %c0_1 = arith.constant 0 : index
    %c0_2 = arith.constant 0 : index
    %2 = vector.load %arg3[%c0_1, %c0_2] : memref<256x128xbf16, #tpu.memory_space<vmem>>, vector<256x128xbf16>
    %cst = arith.constant dense<0.000000e+00> : vector<8x128xf32>
    %3 = tpu.matmul %1, %2, %cst {dimension_numbers = #tpu.dot_dimension_numbers<[1], [0], [0], [1], [0, 0, 1, 1], [], []>} : vector<8x256xbf16>, vector<256x128xbf16>, vector<8x128xf32> -> vector<8x128xf32>
    %c0_3 = arith.constant 0 : index
    %c0_4 = arith.constant 0 : index
    %4 = vector.load %arg4[%c0_3, %c0_4] : memref<1x128xf32, #tpu.memory_space<vmem>>, vector<1x128xf32>
    %5 = vector.broadcast %4 : vector<1x128xf32> to vector<8x128xf32>
    %6 = arith.addf %3, %5 : vector<8x128xf32>
    %cst_5 = arith.constant 0.000000e+00 : f32
    %7 = vector.broadcast %cst_5 : f32 to vector<8x128xf32>
    %8 = arith.maximumf %6, %7 : vector<8x128xf32>
    %9 = arith.truncf %8 : vector<8x128xf32> to vector<8x128xbf16>
    %c0_6 = arith.constant 0 : index
    %c0_7 = arith.constant 0 : index
    %10 = vector.load %arg5[%c0_6, %c0_7] : memref<128x64xbf16, #tpu.memory_space<vmem>>, vector<128x64xbf16>
    %cst_8 = arith.constant dense<0.000000e+00> : vector<8x64xf32>
    %11 = tpu.matmul %9, %10, %cst_8 {dimension_numbers = #tpu.dot_dimension_numbers<[1], [0], [0], [1], [0, 0, 1, 1], [], []>} : vector<8x128xbf16>, vector<128x64xbf16>, vector<8x64xf32> -> vector<8x64xf32>
    %c0_9 = arith.constant 0 : index
    %c0_10 = arith.constant 0 : index
    %12 = vector.load %arg6[%c0_9, %c0_10] : memref<1x64xf32, #tpu.memory_space<vmem>>, vector<1x64xf32>
    %13 = vector.broadcast %12 : vector<1x64xf32> to vector<8x64xf32>
    %14 = arith.addf %11, %13 : vector<8x64xf32>
    %cst_11 = arith.constant 0.000000e+00 : f32
    %15 = vector.broadcast %cst_11 : f32 to vector<8x64xf32>
    %16 = arith.maximumf %14, %15 : vector<8x64xf32>
    %17 = arith.truncf %16 : vector<8x64xf32> to vector<8x64xbf16>
    %c0_12 = arith.constant 0 : index
    %c0_13 = arith.constant 0 : index
    %18 = vector.load %arg7[%c0_12, %c0_13] : memref<64x64xbf16, #tpu.memory_space<vmem>>, vector<64x64xbf16>
    %cst_14 = arith.constant dense<0.000000e+00> : vector<8x64xf32>
    %19 = tpu.matmul %17, %18, %cst_14 {dimension_numbers = #tpu.dot_dimension_numbers<[1], [0], [0], [1], [0, 0, 1, 1], [], []>} : vector<8x64xbf16>, vector<64x64xbf16>, vector<8x64xf32> -> vector<8x64xf32>
    %c0_15 = arith.constant 0 : index
    %c0_16 = arith.constant 0 : index
    %20 = vector.load %arg8[%c0_15, %c0_16] : memref<1x64xf32, #tpu.memory_space<vmem>>, vector<1x64xf32>
    %21 = vector.broadcast %20 : vector<1x64xf32> to vector<8x64xf32>
    %22 = arith.addf %19, %21 : vector<8x64xf32>
    %cst_17 = arith.constant 0.000000e+00 : f32
    %23 = vector.broadcast %cst_17 : f32 to vector<8x64xf32>
    %24 = arith.maximumf %22, %23 : vector<8x64xf32>
    %25 = arith.truncf %24 : vector<8x64xf32> to vector<8x64xbf16>
    %c0_18 = arith.constant 0 : index
    %c0_19 = arith.constant 0 : index
    %26 = vector.load %arg9[%c0_18, %c0_19] : memref<64x128xbf16, #tpu.memory_space<vmem>>, vector<64x128xbf16>
    %cst_20 = arith.constant dense<0.000000e+00> : vector<8x128xf32>
    %27 = tpu.matmul %25, %26, %cst_20 {dimension_numbers = #tpu.dot_dimension_numbers<[1], [0], [0], [1], [0, 0, 1, 1], [], []>} : vector<8x64xbf16>, vector<64x128xbf16>, vector<8x128xf32> -> vector<8x128xf32>
    %c0_21 = arith.constant 0 : index
    %c0_22 = arith.constant 0 : index
    %28 = vector.load %arg10[%c0_21, %c0_22] : memref<1x128xf32, #tpu.memory_space<vmem>>, vector<1x128xf32>
    %29 = vector.broadcast %28 : vector<1x128xf32> to vector<8x128xf32>
    %30 = arith.addf %27, %29 : vector<8x128xf32>
    %31 = vector.extract_strided_slice %30 {offsets = [0, 0], sizes = [8, 32], strides = [1, 1]} : vector<8x128xf32> to vector<8x32xf32>
    %32 = vector.extract_strided_slice %30 {offsets = [0, 32], sizes = [8, 32], strides = [1, 1]} : vector<8x128xf32> to vector<8x32xf32>
    %cst_23 = arith.constant 5.000000e-01 : f32
    %33 = vector.broadcast %cst_23 : f32 to vector<8x32xf32>
    %34 = arith.mulf %33, %32 : vector<8x32xf32>
    %35 = math.exp %34 : vector<8x32xf32>
    %c0_24 = arith.constant 0 : index
    %c0_25 = arith.constant 0 : index
    %36 = vector.load %arg2[%c0_24, %c0_25] : memref<8x32xf32, #tpu.memory_space<vmem>>, vector<8x32xf32>
    %37 = arith.mulf %36, %35 : vector<8x32xf32>
    %38 = arith.addf %37, %31 : vector<8x32xf32>
    %39 = arith.truncf %38 : vector<8x32xf32> to vector<8x32xbf16>
    %c0_26 = arith.constant 0 : index
    %c0_27 = arith.constant 0 : index
    %40 = vector.load %arg11[%c0_26, %c0_27] : memref<32x64xbf16, #tpu.memory_space<vmem>>, vector<32x64xbf16>
    %cst_28 = arith.constant dense<0.000000e+00> : vector<8x64xf32>
    %41 = tpu.matmul %39, %40, %cst_28 {dimension_numbers = #tpu.dot_dimension_numbers<[1], [0], [0], [1], [0, 0, 1, 1], [], []>} : vector<8x32xbf16>, vector<32x64xbf16>, vector<8x64xf32> -> vector<8x64xf32>
    %c0_29 = arith.constant 0 : index
    %c0_30 = arith.constant 0 : index
    %42 = vector.load %arg12[%c0_29, %c0_30] : memref<1x64xf32, #tpu.memory_space<vmem>>, vector<1x64xf32>
    %43 = vector.broadcast %42 : vector<1x64xf32> to vector<8x64xf32>
    %44 = arith.addf %41, %43 : vector<8x64xf32>
    %cst_31 = arith.constant 0.000000e+00 : f32
    %45 = vector.broadcast %cst_31 : f32 to vector<8x64xf32>
    %46 = arith.maximumf %44, %45 : vector<8x64xf32>
    %47 = arith.truncf %46 : vector<8x64xf32> to vector<8x64xbf16>
    %c0_32 = arith.constant 0 : index
    %c0_33 = arith.constant 0 : index
    %48 = vector.load %arg13[%c0_32, %c0_33] : memref<64x64xbf16, #tpu.memory_space<vmem>>, vector<64x64xbf16>
    %cst_34 = arith.constant dense<0.000000e+00> : vector<8x64xf32>
    %49 = tpu.matmul %47, %48, %cst_34 {dimension_numbers = #tpu.dot_dimension_numbers<[1], [0], [0], [1], [0, 0, 1, 1], [], []>} : vector<8x64xbf16>, vector<64x64xbf16>, vector<8x64xf32> -> vector<8x64xf32>
    %c0_35 = arith.constant 0 : index
    %c0_36 = arith.constant 0 : index
    %50 = vector.load %arg14[%c0_35, %c0_36] : memref<1x64xf32, #tpu.memory_space<vmem>>, vector<1x64xf32>
    %51 = vector.broadcast %50 : vector<1x64xf32> to vector<8x64xf32>
    %52 = arith.addf %49, %51 : vector<8x64xf32>
    %cst_37 = arith.constant 0.000000e+00 : f32
    %53 = vector.broadcast %cst_37 : f32 to vector<8x64xf32>
    %54 = arith.maximumf %52, %53 : vector<8x64xf32>
    %55 = arith.truncf %54 : vector<8x64xf32> to vector<8x64xbf16>
    %c0_38 = arith.constant 0 : index
    %c0_39 = arith.constant 0 : index
    %56 = vector.load %arg15[%c0_38, %c0_39] : memref<64x128xbf16, #tpu.memory_space<vmem>>, vector<64x128xbf16>
    %cst_40 = arith.constant dense<0.000000e+00> : vector<8x128xf32>
    %57 = tpu.matmul %55, %56, %cst_40 {dimension_numbers = #tpu.dot_dimension_numbers<[1], [0], [0], [1], [0, 0, 1, 1], [], []>} : vector<8x64xbf16>, vector<64x128xbf16>, vector<8x128xf32> -> vector<8x128xf32>
    %c0_41 = arith.constant 0 : index
    %c0_42 = arith.constant 0 : index
    %58 = vector.load %arg16[%c0_41, %c0_42] : memref<1x128xf32, #tpu.memory_space<vmem>>, vector<1x128xf32>
    %59 = vector.broadcast %58 : vector<1x128xf32> to vector<8x128xf32>
    %60 = arith.addf %57, %59 : vector<8x128xf32>
    %cst_43 = arith.constant 0.000000e+00 : f32
    %61 = vector.broadcast %cst_43 : f32 to vector<8x128xf32>
    %62 = arith.maximumf %60, %61 : vector<8x128xf32>
    %63 = arith.truncf %62 : vector<8x128xf32> to vector<8x128xbf16>
    %c0_44 = arith.constant 0 : index
    %c0_45 = arith.constant 0 : index
    %64 = vector.load %arg17[%c0_44, %c0_45] : memref<128x256xbf16, #tpu.memory_space<vmem>>, vector<128x256xbf16>
    %cst_46 = arith.constant dense<0.000000e+00> : vector<8x256xf32>
    %65 = tpu.matmul %63, %64, %cst_46 {dimension_numbers = #tpu.dot_dimension_numbers<[1], [0], [0], [1], [0, 0, 1, 1], [], []>} : vector<8x128xbf16>, vector<128x256xbf16>, vector<8x256xf32> -> vector<8x256xf32>
    %c0_47 = arith.constant 0 : index
    %c0_48 = arith.constant 0 : index
    %66 = vector.load %arg18[%c0_47, %c0_48] : memref<1x256xf32, #tpu.memory_space<vmem>>, vector<1x256xf32>
    %67 = vector.broadcast %66 : vector<1x256xf32> to vector<8x256xf32>
    %68 = arith.addf %65, %67 : vector<8x256xf32>
    %69 = arith.negf %68 : vector<8x256xf32>
    %70 = math.exp %69 : vector<8x256xf32>
    %cst_49 = arith.constant 1.000000e+00 : f32
    %71 = vector.broadcast %cst_49 : f32 to vector<8x256xf32>
    %72 = arith.addf %71, %70 : vector<8x256xf32>
    %73 = arith.divf %71, %72 : vector<8x256xf32>
    %c0_50 = arith.constant 0 : index
    %c0_51 = arith.constant 0 : index
    %74 = vector.load %arg19[%c0_50, %c0_51] : memref<8x256xf32, #tpu.memory_space<vmem>>, vector<8x256xf32>
    tpu.vector_store %arg19[%c0_50, %c0_51], %73 {strides = array<i32>} : memref<8x256xf32, #tpu.memory_space<vmem>>, vector<8x256xf32>,
    %c0_52 = arith.constant 0 : index
    %c0_53 = arith.constant 0 : index
    %75 = vector.load %arg20[%c0_52, %c0_53] : memref<8x128xf32, #tpu.memory_space<vmem>>, vector<8x128xf32>
    tpu.vector_store %arg20[%c0_52, %c0_53], %30 {strides = array<i32>} : memref<8x128xf32, #tpu.memory_space<vmem>>, vector<8x128xf32>,
    return
  }
  func.func @transform_0(%arg0: i32) -> (i32, i32) {
    %c0_i32 = arith.constant 0 : i32
    %c0_i32_0 = arith.constant 0 : i32
    return %arg0, %c0_i32 : i32, i32
  }
  func.func @transform_1(%arg0: i32) -> (i32, i32) {
    %c0_i32 = arith.constant 0 : i32
    %c0_i32_0 = arith.constant 0 : i32
    return %arg0, %c0_i32 : i32, i32
  }
  func.func @transform_2(%arg0: i32) -> (i32, i32) {
    %c0_i32 = arith.constant 0 : i32
    %c0_i32_0 = arith.constant 0 : i32
    %c0_i32_1 = arith.constant 0 : i32
    return %c0_i32, %c0_i32_0 : i32, i32
  }
  func.func @transform_3(%arg0: i32) -> (i32, i32) {
    %c0_i32 = arith.constant 0 : i32
    %c0_i32_0 = arith.constant 0 : i32
    %c0_i32_1 = arith.constant 0 : i32
    return %c0_i32, %c0_i32_0 : i32, i32
  }
  func.func @transform_4(%arg0: i32) -> (i32, i32) {
    %c0_i32 = arith.constant 0 : i32
    %c0_i32_0 = arith.constant 0 : i32
    %c0_i32_1 = arith.constant 0 : i32
    return %c0_i32, %c0_i32_0 : i32, i32
  }
  func.func @transform_5(%arg0: i32) -> (i32, i32) {
    %c0_i32 = arith.constant 0 : i32
    %c0_i32_0 = arith.constant 0 : i32
    %c0_i32_1 = arith.constant 0 : i32
    return %c0_i32, %c0_i32_0 : i32, i32
  }
  func.func @transform_6(%arg0: i32) -> (i32, i32) {
    %c0_i32 = arith.constant 0 : i32
    %c0_i32_0 = arith.constant 0 : i32
    %c0_i32_1 = arith.constant 0 : i32
    return %c0_i32, %c0_i32_0 : i32, i32
  }
  func.func @transform_7(%arg0: i32) -> (i32, i32) {
    %c0_i32 = arith.constant 0 : i32
    %c0_i32_0 = arith.constant 0 : i32
    %c0_i32_1 = arith.constant 0 : i32
    return %c0_i32, %c0_i32_0 : i32, i32
  }
  func.func @transform_8(%arg0: i32) -> (i32, i32) {
    %c0_i32 = arith.constant 0 : i32
    %c0_i32_0 = arith.constant 0 : i32
    %c0_i32_1 = arith.constant 0 : i32
    return %c0_i32, %c0_i32_0 : i32, i32
  }
  func.func @transform_9(%arg0: i32) -> (i32, i32) {
    %c0_i32 = arith.constant 0 : i32
    %c0_i32_0 = arith.constant 0 : i32
    %c0_i32_1 = arith.constant 0 : i32
    return %c0_i32, %c0_i32_0 : i32, i32
  }
  func.func @transform_10(%arg0: i32) -> (i32, i32) {
    %c0_i32 = arith.constant 0 : i32
    %c0_i32_0 = arith.constant 0 : i32
    %c0_i32_1 = arith.constant 0 : i32
    return %c0_i32, %c0_i32_0 : i32, i32
  }
  func.func @transform_11(%arg0: i32) -> (i32, i32) {
    %c0_i32 = arith.constant 0 : i32
    %c0_i32_0 = arith.constant 0 : i32
    %c0_i32_1 = arith.constant 0 : i32
    return %c0_i32, %c0_i32_0 : i32, i32
  }
  func.func @transform_12(%arg0: i32) -> (i32, i32) {
    %c0_i32 = arith.constant 0 : i32
    %c0_i32_0 = arith.constant 0 : i32
    %c0_i32_1 = arith.constant 0 : i32
    return %c0_i32, %c0_i32_0 : i32, i32
  }
  func.func @transform_13(%arg0: i32) -> (i32, i32) {
    %c0_i32 = arith.constant 0 : i32
    %c0_i32_0 = arith.constant 0 : i32
    %c0_i32_1 = arith.constant 0 : i32
    return %c0_i32, %c0_i32_0 : i32, i32
  }
  func.func @transform_14(%arg0: i32) -> (i32, i32) {
    %c0_i32 = arith.constant 0 : i32
    %c0_i32_0 = arith.constant 0 : i32
    %c0_i32_1 = arith.constant 0 : i32
    return %c0_i32, %c0_i32_0 : i32, i32
  }
  func.func @transform_15(%arg0: i32) -> (i32, i32) {
    %c0_i32 = arith.constant 0 : i32
    %c0_i32_0 = arith.constant 0 : i32
    %c0_i32_1 = arith.constant 0 : i32
    return %c0_i32, %c0_i32_0 : i32, i32
  }
  func.func @transform_16(%arg0: i32) -> (i32, i32) {
    %c0_i32 = arith.constant 0 : i32
    %c0_i32_0 = arith.constant 0 : i32
    %c0_i32_1 = arith.constant 0 : i32
    return %c0_i32, %c0_i32_0 : i32, i32
  }
  func.func @transform_17(%arg0: i32) -> (i32, i32) {
    %c0_i32 = arith.constant 0 : i32
    %c0_i32_0 = arith.constant 0 : i32
    %c0_i32_1 = arith.constant 0 : i32
    return %c0_i32, %c0_i32_0 : i32, i32
  }
  func.func @transform_18(%arg0: i32) -> (i32, i32) {
    %c0_i32 = arith.constant 0 : i32
    %c0_i32_0 = arith.constant 0 : i32
    return %arg0, %c0_i32 : i32, i32
  }
  func.func @transform_19(%arg0: i32) -> (i32, i32) {
    %c0_i32 = arith.constant 0 : i32
    %c0_i32_0 = arith.constant 0 : i32
    return %arg0, %c0_i32 : i32, i32
  }
}

</mosaic_0001>

<llo_original>
// kernel: linear_vae_forward.1
$region0: #{linear_vae_forward.1}
  #allocation0 [shape = 'u32[]', space=smem, size = 0x4, offset = 0x4, fixed_abs, tag = 'smem constant byte address 0x4 - core index']
  #allocation1 [shape = 'u32[144,128]{1,0:T(1,128)}', space=vmem, size = 0x12000, scoped, tag = 'internal scratch']
  %s0 = inlined_call_operand.vmem [shape: f32[8,256], index: 0, kind: input, shape index: {}]
  %s1 = inlined_call_operand.vmem [shape: f32[8,32], index: 1, kind: input, shape index: {}]
  %s2 = inlined_call_operand.vmem [shape: bf16[256,128], index: 2, kind: input, shape index: {}]
  %s3 = inlined_call_operand.vmem [shape: f32[1,128], index: 3, kind: input, shape index: {}]
  %s4 = inlined_call_operand.vmem [shape: bf16[128,64], index: 4, kind: input, shape index: {}]
  %s5 = inlined_call_operand.vmem [shape: f32[1,64], index: 5, kind: input, shape index: {}]
  %s6 = inlined_call_operand.vmem [shape: bf16[64,64], index: 6, kind: input, shape index: {}]
  %s7 = inlined_call_operand.vmem [shape: f32[1,64], index: 7, kind: input, shape index: {}]
  %s8 = inlined_call_operand.vmem [shape: bf16[64,128], index: 8, kind: input, shape index: {}]
  %s9 = inlined_call_operand.vmem [shape: f32[1,128], index: 9, kind: input, shape index: {}]
  %s10 = inlined_call_operand.vmem [shape: bf16[32,64], index: 10, kind: input, shape index: {}]
  %s11 = inlined_call_operand.vmem [shape: f32[1,64], index: 11, kind: input, shape index: {}]
  %s12 = inlined_call_operand.vmem [shape: bf16[64,64], index: 12, kind: input, shape index: {}]
  %s13 = inlined_call_operand.vmem [shape: f32[1,64], index: 13, kind: input, shape index: {}]
  %s14 = inlined_call_operand.vmem [shape: bf16[64,128], index: 14, kind: input, shape index: {}]
  %s15 = inlined_call_operand.vmem [shape: f32[1,128], index: 15, kind: input, shape index: {}]
  %s16 = inlined_call_operand.vmem [shape: bf16[128,256], index: 16, kind: input, shape index: {}]
  %s17 = inlined_call_operand.vmem [shape: f32[1,256], index: 17, kind: input, shape index: {}]
  %s18 = inlined_call_operand.vmem [shape: f32[8,256], index: 18, kind: output, shape index: {0}]
  %s19 = inlined_call_operand.vmem [shape: f32[8,128], index: 19, kind: output, shape index: {1}]
  %20 = xla_tuple %s18, %s19
  %s21 = sld [smem:[#allocation0]]
  $region90: #{linear_vae_forward.1} parent=0
    _
  %s23 = ssub.s32 1, %s21
  %s24 = scalar_select 0, %s23, %s21
  // Predicated region
  $region2: #{linear_vae_forward.1} parent=0 // pred_check
    _
  $region3: #{linear_vae_forward.1} parent=0 // pred_check_branch
    %26 = sbr.rel (0) target = $region5
  $region4: #{linear_vae_forward.1} parent=0 // pred_region
    _
  $region5: #{linear_vae_forward.1} parent=0 // pred_fallthru
    _
  // Predicated region
  $region6: #{linear_vae_forward.1} parent=0 // pred_check
    _
  $region7: #{linear_vae_forward.1} parent=0 // pred_check_branch
    %28 = sbr.rel (0) target = $region9
  $region8: #{linear_vae_forward.1} parent=0 // pred_region
    _
  $region9: #{linear_vae_forward.1} parent=0 // pred_fallthru
    _
  // Predicated region
  $region10: #{linear_vae_forward.1} parent=0 // pred_check
    _
  $region11: #{linear_vae_forward.1} parent=0 // pred_check_branch
    %30 = sbr.rel (0) target = $region13
  $region12: #{linear_vae_forward.1} parent=0 // pred_region
    _
  $region13: #{linear_vae_forward.1} parent=0 // pred_fallthru
    _
  // Predicated region
  $region14: #{linear_vae_forward.1} parent=0 // pred_check
    _
  $region15: #{linear_vae_forward.1} parent=0 // pred_check_branch
    %32 = sbr.rel (0) target = $region17
  $region16: #{linear_vae_forward.1} parent=0 // pred_region
    _
  $region17: #{linear_vae_forward.1} parent=0 // pred_fallthru
    _
  // Predicated region
  $region18: #{linear_vae_forward.1} parent=0 // pred_check
    _
  $region19: #{linear_vae_forward.1} parent=0 // pred_check_branch
    %34 = sbr.rel (0) target = $region21
  $region20: #{linear_vae_forward.1} parent=0 // pred_region
    _
  $region21: #{linear_vae_forward.1} parent=0 // pred_fallthru
    _
  // Predicated region
  $region22: #{linear_vae_forward.1} parent=0 // pred_check
    _
  $region23: #{linear_vae_forward.1} parent=0 // pred_check_branch
    %36 = sbr.rel (0) target = $region25
  $region24: #{linear_vae_forward.1} parent=0 // pred_region
    _
  $region25: #{linear_vae_forward.1} parent=0 // pred_fallthru
    _
  // Predicated region
  $region26: #{linear_vae_forward.1} parent=0 // pred_check
    _
  $region27: #{linear_vae_forward.1} parent=0 // pred_check_branch
    %38 = sbr.rel (0) target = $region29
  $region28: #{linear_vae_forward.1} parent=0 // pred_region
    _
  $region29: #{linear_vae_forward.1} parent=0 // pred_fallthru
    _
  // Predicated region
  $region30: #{linear_vae_forward.1} parent=0 // pred_check
    _
  $region31: #{linear_vae_forward.1} parent=0 // pred_check_branch
    %40 = sbr.rel (0) target = $region33
  $region32: #{linear_vae_forward.1} parent=0 // pred_region
    _
  $region33: #{linear_vae_forward.1} parent=0 // pred_fallthru
    _
  // Predicated region
  $region34: #{linear_vae_forward.1} parent=0 // pred_check
    _
  $region35: #{linear_vae_forward.1} parent=0 // pred_check_branch
    %42 = sbr.rel (0) target = $region37
  $region36: #{linear_vae_forward.1} parent=0 // pred_region
    _
  $region37: #{linear_vae_forward.1} parent=0 // pred_fallthru
    _
  // Predicated region
  $region38: #{linear_vae_forward.1} parent=0 // pred_check
    _
  $region39: #{linear_vae_forward.1} parent=0 // pred_check_branch
    %44 = sbr.rel (0) target = $region41
  $region40: #{linear_vae_forward.1} parent=0 // pred_region
    _
  $region41: #{linear_vae_forward.1} parent=0 // pred_fallthru
    _
  // Predicated region
  $region42: #{linear_vae_forward.1} parent=0 // pred_check
    _
  $region43: #{linear_vae_forward.1} parent=0 // pred_check_branch
    %46 = sbr.rel (0) target = $region45
  $region44: #{linear_vae_forward.1} parent=0 // pred_region
    _
  $region45: #{linear_vae_forward.1} parent=0 // pred_fallthru
    _
  // Predicated region
  $region46: #{linear_vae_forward.1} parent=0 // pred_check
    _
  $region47: #{linear_vae_forward.1} parent=0 // pred_check_branch
    %48 = sbr.rel (0) target = $region49
  $region48: #{linear_vae_forward.1} parent=0 // pred_region
    _
  $region49: #{linear_vae_forward.1} parent=0 // pred_fallthru
    _
  // Predicated region
  $region50: #{linear_vae_forward.1} parent=0 // pred_check
    _
  $region51: #{linear_vae_forward.1} parent=0 // pred_check_branch
    %50 = sbr.rel (0) target = $region53
  $region52: #{linear_vae_forward.1} parent=0 // pred_region
    _
  $region53: #{linear_vae_forward.1} parent=0 // pred_fallthru
    _
  // Predicated region
  $region54: #{linear_vae_forward.1} parent=0 // pred_check
    _
  $region55: #{linear_vae_forward.1} parent=0 // pred_check_branch
    %52 = sbr.rel (0) target = $region57
  $region56: #{linear_vae_forward.1} parent=0 // pred_region
    _
  $region57: #{linear_vae_forward.1} parent=0 // pred_fallthru
    _
  // Predicated region
  $region58: #{linear_vae_forward.1} parent=0 // pred_check
    _
  $region59: #{linear_vae_forward.1} parent=0 // pred_check_branch
    %54 = sbr.rel (0) target = $region61
  $region60: #{linear_vae_forward.1} parent=0 // pred_region
    _
  $region61: #{linear_vae_forward.1} parent=0 // pred_fallthru
    _
  // Predicated region
  $region62: #{linear_vae_forward.1} parent=0 // pred_check
    _
  $region63: #{linear_vae_forward.1} parent=0 // pred_check_branch
    %56 = sbr.rel (0) target = $region65
  $region64: #{linear_vae_forward.1} parent=0 // pred_region
    _
  $region65: #{linear_vae_forward.1} parent=0 // pred_fallthru
    _
  // Predicated region
  $region66: #{linear_vae_forward.1} parent=0 // pred_check
    _
  $region67: #{linear_vae_forward.1} parent=0 // pred_check_branch
    %58 = sbr.rel (0) target = $region69
  $region68: #{linear_vae_forward.1} parent=0 // pred_region
    _
  $region69: #{linear_vae_forward.1} parent=0 // pred_fallthru
    _
  // Predicated region
  $region70: #{linear_vae_forward.1} parent=0 // pred_check
    _
  $region71: #{linear_vae_forward.1} parent=0 // pred_check_branch
    %60 = sbr.rel (0) target = $region73
  $region72: #{linear_vae_forward.1} parent=0 // pred_region
    _
  $region73: #{linear_vae_forward.1} parent=0 // pred_fallthru
    _
  %v62 = vld [vmem:[%s0] sm:$0xff]
  %v63 = vld [vmem:[%s0 + $0x8] sm:$0xff]
  %v64 = vpack.c.bf16 %v62, %v62
  %v65 = vpack.c.bf16 %v63, %v63
  %v66 = vld [vmem:[%s2] sm:$0xf]
  %v67 = vld [vmem:[%s2 + $0x4] sm:$0xf]
  %v68 = vld [vmem:[%s2 + $0x8] sm:$0xf]
  %v69 = vld [vmem:[%s2 + $0xc] sm:$0xf]
  %v70 = vld [vmem:[%s2 + $0x10] sm:$0xf]
  %v71 = vld [vmem:[%s2 + $0x14] sm:$0xf]
  %v72 = vld [vmem:[%s2 + $0x18] sm:$0xf]
  %v73 = vld [vmem:[%s2 + $0x1c] sm:$0xf]
  %v74 = vld [vmem:[%s2 + $0x20] sm:$0xf]
  %v75 = vld [vmem:[%s2 + $0x24] sm:$0xf]
  %v76 = vld [vmem:[%s2 + $0x28] sm:$0xf]
  %v77 = vld [vmem:[%s2 + $0x2c] sm:$0xf]
  %v78 = vld [vmem:[%s2 + $0x30] sm:$0xf]
  %v79 = vld [vmem:[%s2 + $0x34] sm:$0xf]
  %v80 = vld [vmem:[%s2 + $0x38] sm:$0xf]
  %v81 = vld [vmem:[%s2 + $0x3c] sm:$0xf]
  %v82 = vld [vmem:[%s2 + $0x40] sm:$0xf]
  %v83 = vld [vmem:[%s2 + $0x44] sm:$0xf]
  %v84 = vld [vmem:[%s2 + $0x48] sm:$0xf]
  %v85 = vld [vmem:[%s2 + $0x4c] sm:$0xf]
  %v86 = vld [vmem:[%s2 + $0x50] sm:$0xf]
  %v87 = vld [vmem:[%s2 + $0x54] sm:$0xf]
  %v88 = vld [vmem:[%s2 + $0x58] sm:$0xf]
  %v89 = vld [vmem:[%s2 + $0x5c] sm:$0xf]
  %v90 = vld [vmem:[%s2 + $0x60] sm:$0xf]
  %v91 = vld [vmem:[%s2 + $0x64] sm:$0xf]
  %v92 = vld [vmem:[%s2 + $0x68] sm:$0xf]
  %v93 = vld [vmem:[%s2 + $0x6c] sm:$0xf]
  %v94 = vld [vmem:[%s2 + $0x70] sm:$0xf]
  %v95 = vld [vmem:[%s2 + $0x74] sm:$0xf]
  %v96 = vld [vmem:[%s2 + $0x78] sm:$0xf]
  %v97 = vld [vmem:[%s2 + $0x7c] sm:$0xf]
  %v98 = vld [vmem:[%s3] sm:$0x1]
  %v100 = vlaneseq
  %v101 = vshrl.u32 %v100, 7
  %v102 = vsub.s32 0, %v101
  %v103 = vrot.slane %v98, %v102
  %v137 = vunpack.c.l.b16 %v66
  %v138 = vunpack.c.l.b16 %v67
  %v139 = vunpack.c.l.b16 %v68
  %v140 = vunpack.c.l.b16 %v69
  %v141 = vunpack.c.l.b16 %v70
  %v142 = vunpack.c.l.b16 %v71
  %v143 = vunpack.c.l.b16 %v72
  %v144 = vunpack.c.l.b16 %v73
  %v145 = vunpack.c.l.b16 %v74
  %v146 = vunpack.c.l.b16 %v75
  %v147 = vunpack.c.l.b16 %v76
  %v148 = vunpack.c.l.b16 %v77
  %v149 = vunpack.c.l.b16 %v78
  %v150 = vunpack.c.l.b16 %v79
  %v151 = vunpack.c.l.b16 %v80
  %v152 = vunpack.c.l.b16 %v81
  %v153 = vunpack.c.l.b16 %v82
  %v154 = vunpack.c.l.b16 %v83
  %v155 = vunpack.c.l.b16 %v84
  %v156 = vunpack.c.l.b16 %v85
  %v157 = vunpack.c.l.b16 %v86
  %v158 = vunpack.c.l.b16 %v87
  %v159 = vunpack.c.l.b16 %v88
  %v160 = vunpack.c.l.b16 %v89
  %v161 = vunpack.c.l.b16 %v90
  %v162 = vunpack.c.l.b16 %v91
  %v163 = vunpack.c.l.b16 %v92
  %v164 = vunpack.c.l.b16 %v93
  %v165 = vunpack.c.l.b16 %v94
  %v166 = vunpack.c.l.b16 %v95
  %v167 = vunpack.c.l.b16 %v96
  %v168 = vunpack.c.l.b16 %v97
  %v169 = vpack.c.b16 %v138, %v137
  %v170 = vpack.c.b16 %v140, %v139
  %v171 = vpack.c.b16 %v142, %v141
  %v172 = vpack.c.b16 %v144, %v143
  %v173 = vpack.c.b16 %v146, %v145
  %v174 = vpack.c.b16 %v148, %v147
  %v175 = vpack.c.b16 %v150, %v149
  %v176 = vpack.c.b16 %v152, %v151
  %v177 = vpack.c.b16 %v154, %v153
  %v178 = vpack.c.b16 %v156, %v155
  %v179 = vpack.c.b16 %v158, %v157
  %v180 = vpack.c.b16 %v160, %v159
  %v181 = vpack.c.b16 %v162, %v161
  %v182 = vpack.c.b16 %v164, %v163
  %v183 = vpack.c.b16 %v166, %v165
  %v184 = vpack.c.b16 %v168, %v167
  %201 = vmatprep.subr.bf16.mxu0 0
  %202 = vmatpush1.bf16.msra.mxu0 %v176
  %203 = vmatprep.subr.bf16.mxu0 0
  %204 = vmatpush1.bf16.msra.mxu0 %v175
  %205 = vmatprep.subr.bf16.mxu0 0
  %206 = vmatpush1.bf16.msra.mxu0 %v174
  %207 = vmatprep.subr.bf16.mxu0 0
  %208 = vmatpush1.bf16.msra.mxu0 %v173
  %209 = vmatprep.subr.bf16.mxu0 0
  %210 = vmatpush1.bf16.msra.mxu0 %v172
  %211 = vmatprep.subr.bf16.mxu0 0
  %212 = vmatpush1.bf16.msra.mxu0 %v171
  %213 = vmatprep.subr.bf16.mxu0 0
  %214 = vmatpush1.bf16.msra.mxu0 %v170
  %215 = vmatprep.subr.bf16.mxu0 0
  %216 = vmatpush1.bf16.msra.mxu0 %v169
  %217 = vmatprep.subr.bf16.mxu0 0
  %218 = vmatpush2.bf16.msra.mxu0 %v184
  %219 = vmatprep.subr.bf16.mxu0 0
  %220 = vmatpush2.bf16.msra.mxu0 %v183
  %221 = vmatprep.subr.bf16.mxu0 0
  %222 = vmatpush2.bf16.msra.mxu0 %v182
  %223 = vmatprep.subr.bf16.mxu0 0
  %224 = vmatpush2.bf16.msra.mxu0 %v181
  %225 = vmatprep.subr.bf16.mxu0 0
  %226 = vmatpush2.bf16.msra.mxu0 %v180
  %227 = vmatprep.subr.bf16.mxu0 0
  %228 = vmatpush2.bf16.msra.mxu0 %v179
  %229 = vmatprep.subr.bf16.mxu0 0
  %230 = vmatpush2.bf16.msra.mxu0 %v178
  %231 = vmatprep.subr.bf16.mxu0 0
  %232 = vmatpush2.bf16.msra.mxu0 %v177
  %233 = vmatprep.mubr.bf16.mxu0 %v65
  %234 = vmatmul.mubr.bf16.gmra.mxu0 %v64
  %v235 = vpop.f32.mrf.mxu0
  %v236 = vadd.f32 %v103, %v235
  %v237 = vpop.f32.mrf.mxu0
  %v238 = vpop.f32.mrf.mxu0
  %v239 = vpop.f32.mrf.mxu0
  %240 = vdwg.mxu0
  %v241 = vmax.f32 %v236, 0.0
  %v242 = vpack.c.bf16 %v241, %v241
  %v243 = vld [vmem:[%s4] sm:$0xf]
  %v244 = vld [vmem:[%s4 + $0x4] sm:$0xf]
  %v245 = vld [vmem:[%s4 + $0x8] sm:$0xf]
  %v246 = vld [vmem:[%s4 + $0xc] sm:$0xf]
  %v247 = vld [vmem:[%s4 + $0x10] sm:$0xf]
  %v248 = vld [vmem:[%s4 + $0x14] sm:$0xf]
  %v249 = vld [vmem:[%s4 + $0x18] sm:$0xf]
  %v250 = vld [vmem:[%s4 + $0x1c] sm:$0xf]
  %v251 = vld [vmem:[%s4 + $0x20] sm:$0xf]
  %v252 = vld [vmem:[%s4 + $0x24] sm:$0xf]
  %v253 = vld [vmem:[%s4 + $0x28] sm:$0xf]
  %v254 = vld [vmem:[%s4 + $0x2c] sm:$0xf]
  %v255 = vld [vmem:[%s4 + $0x30] sm:$0xf]
  %v256 = vld [vmem:[%s4 + $0x34] sm:$0xf]
  %v257 = vld [vmem:[%s4 + $0x38] sm:$0xf]
  %v258 = vld [vmem:[%s4 + $0x3c] sm:$0xf]
  %v259 = vld [vmem:[%s5] sm:$0x1]
  %v261 = vlaneseq
  %v262 = vshrl.u32 %v261, 7
  %v263 = vsub.s32 0, %v262
  %v264 = vrot.slane %v259, %v263
  %v282 = vunpack.c.l.b16 %v243
  %v283 = vunpack.c.l.b16 %v244
  %v284 = vunpack.c.l.b16 %v245
  %v285 = vunpack.c.l.b16 %v246
  %v286 = vunpack.c.l.b16 %v247
  %v287 = vunpack.c.l.b16 %v248
  %v288 = vunpack.c.l.b16 %v249
  %v289 = vunpack.c.l.b16 %v250
  %v290 = vunpack.c.l.b16 %v251
  %v291 = vunpack.c.l.b16 %v252
  %v292 = vunpack.c.l.b16 %v253
  %v293 = vunpack.c.l.b16 %v254
  %v294 = vunpack.c.l.b16 %v255
  %v295 = vunpack.c.l.b16 %v256
  %v296 = vunpack.c.l.b16 %v257
  %v297 = vunpack.c.l.b16 %v258
  %v298 = vpack.c.b16 %v283, %v282
  %v299 = vpack.c.b16 %v285, %v284
  %v300 = vpack.c.b16 %v287, %v286
  %v301 = vpack.c.b16 %v289, %v288
  %v302 = vpack.c.b16 %v291, %v290
  %v303 = vpack.c.b16 %v293, %v292
  %v304 = vpack.c.b16 %v295, %v294
  %v305 = vpack.c.b16 %v297, %v296
  %314 = vmatprep.subr.bf16.mxu0 0
  %315 = vmatpush1.bf16.msra.mxu0 %v305
  %316 = vmatprep.subr.bf16.mxu0 0
  %317 = vmatpush1.bf16.msra.mxu0 %v304
  %318 = vmatprep.subr.bf16.mxu0 0
  %319 = vmatpush1.bf16.msra.mxu0 %v303
  %320 = vmatprep.subr.bf16.mxu0 0
  %321 = vmatpush1.bf16.msra.mxu0 %v302
  %322 = vmatprep.subr.bf16.mxu0 0
  %323 = vmatpush1.bf16.msra.mxu0 %v301
  %324 = vmatprep.subr.bf16.mxu0 0
  %325 = vmatpush1.bf16.msra.mxu0 %v300
  %326 = vmatprep.subr.bf16.mxu0 0
  %327 = vmatpush1.bf16.msra.mxu0 %v299
  %328 = vmatprep.subr.bf16.mxu0 0
  %329 = vmatpush1.bf16.msra.mxu0 %v298
  %330 = vmatprep.subr.bf16.mxu0 0
  %331 = vmatpush2.bf16.msra.mxu0 0
  %332 = vmatprep.subr.bf16.mxu0 0
  %333 = vmatpush2.bf16.msra.mxu0 0
  %334 = vmatprep.subr.bf16.mxu0 0
  %335 = vmatpush2.bf16.msra.mxu0 0
  %336 = vmatprep.subr.bf16.mxu0 0
  %337 = vmatpush2.bf16.msra.mxu0 0
  %338 = vmatprep.subr.bf16.mxu0 0
  %339 = vmatpush2.bf16.msra.mxu0 0
  %340 = vmatprep.subr.bf16.mxu0 0
  %341 = vmatpush2.bf16.msra.mxu0 0
  %342 = vmatprep.subr.bf16.mxu0 0
  %343 = vmatpush2.bf16.msra.mxu0 0
  %344 = vmatprep.subr.bf16.mxu0 0
  %345 = vmatpush2.bf16.msra.mxu0 0
  %346 = vmatprep.mubr.bf16.mxu0 0
  %347 = vmatmul.mubr.bf16.gmra.mxu0 %v242
  %v348 = vpop.f32.mrf.mxu0
  %v349 = vadd.f32 %v264, %v348
  %v350 = vpop.f32.mrf.mxu0
  %v351 = vpop.f32.mrf.mxu0
  %v352 = vpop.f32.mrf.mxu0
  %353 = vdwg.mxu0
  %v354 = vmax.f32 %v349, 0.0
  %v355 = vpack.c.bf16 %v354, %v354
  %v356 = vld [vmem:[%s6] sm:$0xf]
  %v357 = vld [vmem:[%s6 + $0x4] sm:$0xf]
  %v358 = vld [vmem:[%s6 + $0x8] sm:$0xf]
  %v359 = vld [vmem:[%s6 + $0xc] sm:$0xf]
  %v360 = vld [vmem:[%s6 + $0x10] sm:$0xf]
  %v361 = vld [vmem:[%s6 + $0x14] sm:$0xf]
  %v362 = vld [vmem:[%s6 + $0x18] sm:$0xf]
  %v363 = vld [vmem:[%s6 + $0x1c] sm:$0xf]
  %v364 = vld [vmem:[%s7] sm:$0x1]
  %v366 = vlaneseq
  %v367 = vshrl.u32 %v366, 7
  %v368 = vsub.s32 0, %v367
  %v369 = vrot.slane %v364, %v368
  %v379 = vunpack.c.l.b16 %v356
  %v380 = vunpack.c.l.b16 %v357
  %v381 = vunpack.c.l.b16 %v358
  %v382 = vunpack.c.l.b16 %v359
  %v383 = vunpack.c.l.b16 %v360
  %v384 = vunpack.c.l.b16 %v361
  %v385 = vunpack.c.l.b16 %v362
  %v386 = vunpack.c.l.b16 %v363
  %v387 = vpack.c.b16 %v380, %v379
  %v388 = vpack.c.b16 %v382, %v381
  %v389 = vpack.c.b16 %v384, %v383
  %v390 = vpack.c.b16 %v386, %v385
  %vm395 = vcmask 523264
  %v397 = vsel %vm395, %v355, 0
  %399 = vmatprep.subr.bf16.mxu0 0
  %400 = vmatpush1.bf16.msra.mxu0 0
  %401 = vmatprep.subr.bf16.mxu0 0
  %402 = vmatpush1.bf16.msra.mxu0 0
  %403 = vmatprep.subr.bf16.mxu0 0
  %404 = vmatpush1.bf16.msra.mxu0 0
  %405 = vmatprep.subr.bf16.mxu0 0
  %406 = vmatpush1.bf16.msra.mxu0 0
  %407 = vmatprep.subr.bf16.mxu0 0
  %408 = vmatpush1.bf16.msra.mxu0 %v390
  %409 = vmatprep.subr.bf16.mxu0 0
  %410 = vmatpush1.bf16.msra.mxu0 %v389
  %411 = vmatprep.subr.bf16.mxu0 0
  %412 = vmatpush1.bf16.msra.mxu0 %v388
  %413 = vmatprep.subr.bf16.mxu0 0
  %414 = vmatpush1.bf16.msra.mxu0 %v387
  %415 = vmatprep.subr.bf16.mxu0 0
  %416 = vmatpush2.bf16.msra.mxu0 0
  %417 = vmatprep.subr.bf16.mxu0 0
  %418 = vmatpush2.bf16.msra.mxu0 0
  %419 = vmatprep.subr.bf16.mxu0 0
  %420 = vmatpush2.bf16.msra.mxu0 0
  %421 = vmatprep.subr.bf16.mxu0 0
  %422 = vmatpush2.bf16.msra.mxu0 0
  %423 = vmatprep.subr.bf16.mxu0 0
  %424 = vmatpush2.bf16.msra.mxu0 0
  %425 = vmatprep.subr.bf16.mxu0 0
  %426 = vmatpush2.bf16.msra.mxu0 0
  %427 = vmatprep.subr.bf16.mxu0 0
  %428 = vmatpush2.bf16.msra.mxu0 0
  %429 = vmatprep.subr.bf16.mxu0 0
  %430 = vmatpush2.bf16.msra.mxu0 0
  %431 = vmatprep.mubr.bf16.mxu0 0
  %432 = vmatmul.mubr.bf16.gmra.mxu0 %v397
  %v433 = vpop.f32.mrf.mxu0
  %v434 = vadd.f32 %v369, %v433
  %v435 = vpop.f32.mrf.mxu0
  %v436 = vpop.f32.mrf.mxu0
  %v437 = vpop.f32.mrf.mxu0
  %438 = vdwg.mxu0
  %v439 = vmax.f32 %v434, 0.0
  %v440 = vpack.c.bf16 %v439, %v439
  %v441 = vld [vmem:[%s8] sm:$0xf]
  %v442 = vld [vmem:[%s8 + $0x4] sm:$0xf]
  %v443 = vld [vmem:[%s8 + $0x8] sm:$0xf]
  %v444 = vld [vmem:[%s8 + $0xc] sm:$0xf]
  %v445 = vld [vmem:[%s8 + $0x10] sm:$0xf]
  %v446 = vld [vmem:[%s8 + $0x14] sm:$0xf]
  %v447 = vld [vmem:[%s8 + $0x18] sm:$0xf]
  %v448 = vld [vmem:[%s8 + $0x1c] sm:$0xf]
  %v449 = vld [vmem:[%s9] sm:$0x1]
  %v451 = vlaneseq
  %v452 = vshrl.u32 %v451, 7
  %v453 = vsub.s32 0, %v452
  %v454 = vrot.slane %v449, %v453
  %v464 = vunpack.c.l.b16 %v441
  %v465 = vunpack.c.l.b16 %v442
  %v466 = vunpack.c.l.b16 %v443
  %v467 = vunpack.c.l.b16 %v444
  %v468 = vunpack.c.l.b16 %v445
  %v469 = vunpack.c.l.b16 %v446
  %v470 = vunpack.c.l.b16 %v447
  %v471 = vunpack.c.l.b16 %v448
  %v472 = vpack.c.b16 %v465, %v464
  %v473 = vpack.c.b16 %v467, %v466
  %v474 = vpack.c.b16 %v469, %v468
  %v475 = vpack.c.b16 %v471, %v470
  %v481 = vsel %vm395, %v440, 0
  %483 = vmatprep.subr.bf16.mxu0 0
  %484 = vmatpush1.bf16.msra.mxu0 0
  %485 = vmatprep.subr.bf16.mxu0 0
  %486 = vmatpush1.bf16.msra.mxu0 0
  %487 = vmatprep.subr.bf16.mxu0 0
  %488 = vmatpush1.bf16.msra.mxu0 0
  %489 = vmatprep.subr.bf16.mxu0 0
  %490 = vmatpush1.bf16.msra.mxu0 0
  %491 = vmatprep.subr.bf16.mxu0 0
  %492 = vmatpush1.bf16.msra.mxu0 %v475
  %493 = vmatprep.subr.bf16.mxu0 0
  %494 = vmatpush1.bf16.msra.mxu0 %v474
  %495 = vmatprep.subr.bf16.mxu0 0
  %496 = vmatpush1.bf16.msra.mxu0 %v473
  %497 = vmatprep.subr.bf16.mxu0 0
  %498 = vmatpush1.bf16.msra.mxu0 %v472
  %499 = vmatprep.subr.bf16.mxu0 0
  %500 = vmatpush2.bf16.msra.mxu0 0
  %501 = vmatprep.subr.bf16.mxu0 0
  %502 = vmatpush2.bf16.msra.mxu0 0
  %503 = vmatprep.subr.bf16.mxu0 0
  %504 = vmatpush2.bf16.msra.mxu0 0
  %505 = vmatprep.subr.bf16.mxu0 0
  %506 = vmatpush2.bf16.msra.mxu0 0
  %507 = vmatprep.subr.bf16.mxu0 0
  %508 = vmatpush2.bf16.msra.mxu0 0
  %509 = vmatprep.subr.bf16.mxu0 0
  %510 = vmatpush2.bf16.msra.mxu0 0
  %511 = vmatprep.subr.bf16.mxu0 0
  %512 = vmatpush2.bf16.msra.mxu0 0
  %513 = vmatprep.subr.bf16.mxu0 0
  %514 = vmatpush2.bf16.msra.mxu0 0
  %515 = vmatprep.mubr.bf16.mxu0 0
  %516 = vmatmul.mubr.bf16.gmra.mxu0 %v481
  %v517 = vpop.f32.mrf.mxu0
  %v518 = vadd.f32 %v454, %v517
  %v519 = vpop.f32.mrf.mxu0
  %v520 = vpop.f32.mrf.mxu0
  %v521 = vpop.f32.mrf.mxu0
  %522 = vdwg.mxu0
  %v523 = vmul.f32 %v518, 0.5
  %v524 = vmul.f32 %v523, 1.442695
  %v525 = vpow.pop %v524
  %v526 = vld [vmem:[%s1] sm:$0xff]
  %528 = vrot.lane.b32.xlu0 %v525, 96
  %v529 = vpop.permute.xlu0 %528
  %v531 = vmul.f32 %v526, %v529
  %v532 = vadd.f32 %v531, %v518
  %v533 = vpack.c.bf16 %v532, %v532
  %v534 = vld [vmem:[%s10] sm:$0xf]
  %v535 = vld [vmem:[%s10 + $0x4] sm:$0xf]
  %v536 = vld [vmem:[%s10 + $0x8] sm:$0xf]
  %v537 = vld [vmem:[%s10 + $0xc] sm:$0xf]
  %v538 = vld [vmem:[%s11] sm:$0x1]
  %v540 = vlaneseq
  %v541 = vshrl.u32 %v540, 7
  %v542 = vsub.s32 0, %v541
  %v543 = vrot.slane %v538, %v542
  %v549 = vunpack.c.l.b16 %v534
  %v550 = vunpack.c.l.b16 %v535
  %v551 = vunpack.c.l.b16 %v536
  %v552 = vunpack.c.l.b16 %v537
  %v553 = vpack.c.b16 %v550, %v549
  %v554 = vpack.c.b16 %v552, %v551
  %vm557 = vcmask 261120
  %v559 = vsel %vm557, %v533, 0
  %561 = vmatprep.subr.bf16.mxu0 0
  %562 = vmatpush1.bf16.msra.mxu0 0
  %563 = vmatprep.subr.bf16.mxu0 0
  %564 = vmatpush1.bf16.msra.mxu0 0
  %565 = vmatprep.subr.bf16.mxu0 0
  %566 = vmatpush1.bf16.msra.mxu0 0
  %567 = vmatprep.subr.bf16.mxu0 0
  %568 = vmatpush1.bf16.msra.mxu0 0
  %569 = vmatprep.subr.bf16.mxu0 0
  %570 = vmatpush1.bf16.msra.mxu0 0
  %571 = vmatprep.subr.bf16.mxu0 0
  %572 = vmatpush1.bf16.msra.mxu0 0
  %573 = vmatprep.subr.bf16.mxu0 0
  %574 = vmatpush1.bf16.msra.mxu0 %v554
  %575 = vmatprep.subr.bf16.mxu0 0
  %576 = vmatpush1.bf16.msra.mxu0 %v553
  %577 = vmatprep.subr.bf16.mxu0 0
  %578 = vmatpush2.bf16.msra.mxu0 0
  %579 = vmatprep.subr.bf16.mxu0 0
  %580 = vmatpush2.bf16.msra.mxu0 0
  %581 = vmatprep.subr.bf16.mxu0 0
  %582 = vmatpush2.bf16.msra.mxu0 0
  %583 = vmatprep.subr.bf16.mxu0 0
  %584 = vmatpush2.bf16.msra.mxu0 0
  %585 = vmatprep.subr.bf16.mxu0 0
  %586 = vmatpush2.bf16.msra.mxu0 0
  %587 = vmatprep.subr.bf16.mxu0 0
  %588 = vmatpush2.bf16.msra.mxu0 0
  %589 = vmatprep.subr.bf16.mxu0 0
  %590 = vmatpush2.bf16.msra.mxu0 0
  %591 = vmatprep.subr.bf16.mxu0 0
  %592 = vmatpush2.bf16.msra.mxu0 0
  %593 = vmatprep.mubr.bf16.mxu0 0
  %594 = vmatmul.mubr.bf16.gmra.mxu0 %v559
  %v595 = vpop.f32.mrf.mxu0
  %v596 = vadd.f32 %v543, %v595
  %v597 = vpop.f32.mrf.mxu0
  %v598 = vpop.f32.mrf.mxu0
  %v599 = vpop.f32.mrf.mxu0
  %600 = vdwg.mxu0
  %v601 = vmax.f32 %v596, 0.0
  %v602 = vpack.c.bf16 %v601, %v601
  %v603 = vld [vmem:[%s12] sm:$0xf]
  %v604 = vld [vmem:[%s12 + $0x4] sm:$0xf]
  %v605 = vld [vmem:[%s12 + $0x8] sm:$0xf]
  %v606 = vld [vmem:[%s12 + $0xc] sm:$0xf]
  %v607 = vld [vmem:[%s12 + $0x10] sm:$0xf]
  %v608 = vld [vmem:[%s12 + $0x14] sm:$0xf]
  %v609 = vld [vmem:[%s12 + $0x18] sm:$0xf]
  %v610 = vld [vmem:[%s12 + $0x1c] sm:$0xf]
  %v611 = vld [vmem:[%s13] sm:$0x1]
  %v613 = vlaneseq
  %v614 = vshrl.u32 %v613, 7
  %v615 = vsub.s32 0, %v614
  %v616 = vrot.slane %v611, %v615
  %v626 = vunpack.c.l.b16 %v603
  %v627 = vunpack.c.l.b16 %v604
  %v628 = vunpack.c.l.b16 %v605
  %v629 = vunpack.c.l.b16 %v606
  %v630 = vunpack.c.l.b16 %v607
  %v631 = vunpack.c.l.b16 %v608
  %v632 = vunpack.c.l.b16 %v609
  %v633 = vunpack.c.l.b16 %v610
  %v634 = vpack.c.b16 %v627, %v626
  %v635 = vpack.c.b16 %v629, %v628
  %v636 = vpack.c.b16 %v631, %v630
  %v637 = vpack.c.b16 %v633, %v632
  %v643 = vsel %vm395, %v602, 0
  %645 = vmatprep.subr.bf16.mxu0 0
  %646 = vmatpush1.bf16.msra.mxu0 0
  %647 = vmatprep.subr.bf16.mxu0 0
  %648 = vmatpush1.bf16.msra.mxu0 0
  %649 = vmatprep.subr.bf16.mxu0 0
  %650 = vmatpush1.bf16.msra.mxu0 0
  %651 = vmatprep.subr.bf16.mxu0 0
  %652 = vmatpush1.bf16.msra.mxu0 0
  %653 = vmatprep.subr.bf16.mxu0 0
  %654 = vmatpush1.bf16.msra.mxu0 %v637
  %655 = vmatprep.subr.bf16.mxu0 0
  %656 = vmatpush1.bf16.msra.mxu0 %v636
  %657 = vmatprep.subr.bf16.mxu0 0
  %658 = vmatpush1.bf16.msra.mxu0 %v635
  %659 = vmatprep.subr.bf16.mxu0 0
  %660 = vmatpush1.bf16.msra.mxu0 %v634
  %661 = vmatprep.subr.bf16.mxu0 0
  %662 = vmatpush2.bf16.msra.mxu0 0
  %663 = vmatprep.subr.bf16.mxu0 0
  %664 = vmatpush2.bf16.msra.mxu0 0
  %665 = vmatprep.subr.bf16.mxu0 0
  %666 = vmatpush2.bf16.msra.mxu0 0
  %667 = vmatprep.subr.bf16.mxu0 0
  %668 = vmatpush2.bf16.msra.mxu0 0
  %669 = vmatprep.subr.bf16.mxu0 0
  %670 = vmatpush2.bf16.msra.mxu0 0
  %671 = vmatprep.subr.bf16.mxu0 0
  %672 = vmatpush2.bf16.msra.mxu0 0
  %673 = vmatprep.subr.bf16.mxu0 0
  %674 = vmatpush2.bf16.msra.mxu0 0
  %675 = vmatprep.subr.bf16.mxu0 0
  %676 = vmatpush2.bf16.msra.mxu0 0
  %677 = vmatprep.mubr.bf16.mxu0 0
  %678 = vmatmul.mubr.bf16.gmra.mxu0 %v643
  %v679 = vpop.f32.mrf.mxu0
  %v680 = vadd.f32 %v616, %v679
  %v681 = vpop.f32.mrf.mxu0
  %v682 = vpop.f32.mrf.mxu0
  %v683 = vpop.f32.mrf.mxu0
  %684 = vdwg.mxu0
  %v685 = vmax.f32 %v680, 0.0
  %v686 = vpack.c.bf16 %v685, %v685
  %v687 = vld [vmem:[%s14] sm:$0xf]
  %v688 = vld [vmem:[%s14 + $0x4] sm:$0xf]
  %v689 = vld [vmem:[%s14 + $0x8] sm:$0xf]
  %v690 = vld [vmem:[%s14 + $0xc] sm:$0xf]
  %v691 = vld [vmem:[%s14 + $0x10] sm:$0xf]
  %v692 = vld [vmem:[%s14 + $0x14] sm:$0xf]
  %v693 = vld [vmem:[%s14 + $0x18] sm:$0xf]
  %v694 = vld [vmem:[%s14 + $0x1c] sm:$0xf]
  %v695 = vld [vmem:[%s15] sm:$0x1]
  %v697 = vlaneseq
  %v698 = vshrl.u32 %v697, 7
  %v699 = vsub.s32 0, %v698
  %v700 = vrot.slane %v695, %v699
  %v710 = vunpack.c.l.b16 %v687
  %v711 = vunpack.c.l.b16 %v688
  %v712 = vunpack.c.l.b16 %v689
  %v713 = vunpack.c.l.b16 %v690
  %v714 = vunpack.c.l.b16 %v691
  %v715 = vunpack.c.l.b16 %v692
  %v716 = vunpack.c.l.b16 %v693
  %v717 = vunpack.c.l.b16 %v694
  %v718 = vpack.c.b16 %v711, %v710
  %v719 = vpack.c.b16 %v713, %v712
  %v720 = vpack.c.b16 %v715, %v714
  %v721 = vpack.c.b16 %v717, %v716
  %v727 = vsel %vm395, %v686, 0
  %729 = vmatprep.subr.bf16.mxu0 0
  %730 = vmatpush1.bf16.msra.mxu0 0
  %731 = vmatprep.subr.bf16.mxu0 0
  %732 = vmatpush1.bf16.msra.mxu0 0
  %733 = vmatprep.subr.bf16.mxu0 0
  %734 = vmatpush1.bf16.msra.mxu0 0
  %735 = vmatprep.subr.bf16.mxu0 0
  %736 = vmatpush1.bf16.msra.mxu0 0
  %737 = vmatprep.subr.bf16.mxu0 0
  %738 = vmatpush1.bf16.msra.mxu0 %v721
  %739 = vmatprep.subr.bf16.mxu0 0
  %740 = vmatpush1.bf16.msra.mxu0 %v720
  %741 = vmatprep.subr.bf16.mxu0 0
  %742 = vmatpush1.bf16.msra.mxu0 %v719
  %743 = vmatprep.subr.bf16.mxu0 0
  %744 = vmatpush1.bf16.msra.mxu0 %v718
  %745 = vmatprep.subr.bf16.mxu0 0
  %746 = vmatpush2.bf16.msra.mxu0 0
  %747 = vmatprep.subr.bf16.mxu0 0
  %748 = vmatpush2.bf16.msra.mxu0 0
  %749 = vmatprep.subr.bf16.mxu0 0
  %750 = vmatpush2.bf16.msra.mxu0 0
  %751 = vmatprep.subr.bf16.mxu0 0
  %752 = vmatpush2.bf16.msra.mxu0 0
  %753 = vmatprep.subr.bf16.mxu0 0
  %754 = vmatpush2.bf16.msra.mxu0 0
  %755 = vmatprep.subr.bf16.mxu0 0
  %756 = vmatpush2.bf16.msra.mxu0 0
  %757 = vmatprep.subr.bf16.mxu0 0
  %758 = vmatpush2.bf16.msra.mxu0 0
  %759 = vmatprep.subr.bf16.mxu0 0
  %760 = vmatpush2.bf16.msra.mxu0 0
  %761 = vmatprep.mubr.bf16.mxu0 0
  %762 = vmatmul.mubr.bf16.gmra.mxu0 %v727
  %v763 = vpop.f32.mrf.mxu0
  %v764 = vadd.f32 %v700, %v763
  %v765 = vpop.f32.mrf.mxu0
  %v766 = vpop.f32.mrf.mxu0
  %v767 = vpop.f32.mrf.mxu0
  %768 = vdwg.mxu0
  %v769 = vmax.f32 %v764, 0.0
  %v770 = vpack.c.bf16 %v769, %v769
  %v771 = vld [vmem:[%s16] sm:$0xff]
  %v772 = vld [vmem:[%s16 + $0x8] sm:$0xff]
  %v773 = vld [vmem:[%s16 + $0x10] sm:$0xff]
  %v774 = vld [vmem:[%s16 + $0x18] sm:$0xff]
  %v775 = vld [vmem:[%s16 + $0x20] sm:$0xff]
  %v776 = vld [vmem:[%s16 + $0x28] sm:$0xff]
  %v777 = vld [vmem:[%s16 + $0x30] sm:$0xff]
  %v778 = vld [vmem:[%s16 + $0x38] sm:$0xff]
  %v779 = vld [vmem:[%s16 + $0x40] sm:$0xff]
  %v780 = vld [vmem:[%s16 + $0x48] sm:$0xff]
  %v781 = vld [vmem:[%s16 + $0x50] sm:$0xff]
  %v782 = vld [vmem:[%s16 + $0x58] sm:$0xff]
  %v783 = vld [vmem:[%s16 + $0x60] sm:$0xff]
  %v784 = vld [vmem:[%s16 + $0x68] sm:$0xff]
  %v785 = vld [vmem:[%s16 + $0x70] sm:$0xff]
  %v786 = vld [vmem:[%s16 + $0x78] sm:$0xff]
  %v787 = vld [vmem:[%s17] sm:$0x3]
  %v789 = vlaneseq
  %v790 = vshrl.u32 %v789, 7
  %v791 = vsub.s32 0, %v790
  %v792 = vrot.slane %v787, %v791
  %v793 = vlaneseq
  %v794 = vshrl.u32 %v793, 7
  %v795 = vsub.s32 1, %v794
  %v796 = vrot.slane %v787, %v795
  %v815 = vunpack.c.l.b16 %v771
  %v816 = vunpack.c.h.b16 %v771
  %v817 = vunpack.c.l.b16 %v772
  %v818 = vunpack.c.h.b16 %v772
  %v819 = vunpack.c.l.b16 %v773
  %v820 = vunpack.c.h.b16 %v773
  %v821 = vunpack.c.l.b16 %v774
  %v822 = vunpack.c.h.b16 %v774
  %v823 = vunpack.c.l.b16 %v775
  %v824 = vunpack.c.h.b16 %v775
  %v825 = vunpack.c.l.b16 %v776
  %v826 = vunpack.c.h.b16 %v776
  %v827 = vunpack.c.l.b16 %v777
  %v828 = vunpack.c.h.b16 %v777
  %v829 = vunpack.c.l.b16 %v778
  %v830 = vunpack.c.h.b16 %v778
  %v831 = vunpack.c.l.b16 %v779
  %v832 = vunpack.c.h.b16 %v779
  %v833 = vunpack.c.l.b16 %v780
  %v834 = vunpack.c.h.b16 %v780
  %v835 = vunpack.c.l.b16 %v781
  %v836 = vunpack.c.h.b16 %v781
  %v837 = vunpack.c.l.b16 %v782
  %v838 = vunpack.c.h.b16 %v782
  %v839 = vunpack.c.l.b16 %v783
  %v840 = vunpack.c.h.b16 %v783
  %v841 = vunpack.c.l.b16 %v784
  %v842 = vunpack.c.h.b16 %v784
  %v843 = vunpack.c.l.b16 %v785
  %v844 = vunpack.c.h.b16 %v785
  %v845 = vunpack.c.l.b16 %v786
  %v846 = vunpack.c.h.b16 %v786
  %v847 = vpack.c.b16 %v817, %v815
  %v848 = vpack.c.b16 %v818, %v816
  %v849 = vpack.c.b16 %v821, %v819
  %v850 = vpack.c.b16 %v822, %v820
  %v851 = vpack.c.b16 %v825, %v823
  %v852 = vpack.c.b16 %v826, %v824
  %v853 = vpack.c.b16 %v829, %v827
  %v854 = vpack.c.b16 %v830, %v828
  %v855 = vpack.c.b16 %v833, %v831
  %v856 = vpack.c.b16 %v834, %v832
  %v857 = vpack.c.b16 %v837, %v835
  %v858 = vpack.c.b16 %v838, %v836
  %v859 = vpack.c.b16 %v841, %v839
  %v860 = vpack.c.b16 %v842, %v840
  %v861 = vpack.c.b16 %v845, %v843
  %v862 = vpack.c.b16 %v846, %v844
  %879 = vmatprep.subr.bf16.mxu0 %v862
  %880 = vmatpush1.bf16.msra.mxu0 %v861
  %881 = vmatprep.subr.bf16.mxu0 %v860
  %882 = vmatpush1.bf16.msra.mxu0 %v859
  %883 = vmatprep.subr.bf16.mxu0 %v858
  %884 = vmatpush1.bf16.msra.mxu0 %v857
  %885 = vmatprep.subr.bf16.mxu0 %v856
  %886 = vmatpush1.bf16.msra.mxu0 %v855
  %887 = vmatprep.subr.bf16.mxu0 %v854
  %888 = vmatpush1.bf16.msra.mxu0 %v853
  %889 = vmatprep.subr.bf16.mxu0 %v852
  %890 = vmatpush1.bf16.msra.mxu0 %v851
  %891 = vmatprep.subr.bf16.mxu0 %v850
  %892 = vmatpush1.bf16.msra.mxu0 %v849
  %893 = vmatprep.subr.bf16.mxu0 %v848
  %894 = vmatpush1.bf16.msra.mxu0 %v847
  %895 = vmatprep.subr.bf16.mxu0 0
  %896 = vmatpush2.bf16.msra.mxu0 0
  %897 = vmatprep.subr.bf16.mxu0 0
  %898 = vmatpush2.bf16.msra.mxu0 0
  %899 = vmatprep.subr.bf16.mxu0 0
  %900 = vmatpush2.bf16.msra.mxu0 0
  %901 = vmatprep.subr.bf16.mxu0 0
  %902 = vmatpush2.bf16.msra.mxu0 0
  %903 = vmatprep.subr.bf16.mxu0 0
  %904 = vmatpush2.bf16.msra.mxu0 0
  %905 = vmatprep.subr.bf16.mxu0 0
  %906 = vmatpush2.bf16.msra.mxu0 0
  %907 = vmatprep.subr.bf16.mxu0 0
  %908 = vmatpush2.bf16.msra.mxu0 0
  %909 = vmatprep.subr.bf16.mxu0 0
  %910 = vmatpush2.bf16.msra.mxu0 0
  %911 = vmatprep.mubr.bf16.mxu0 0
  %912 = vmatmul.mubr.bf16.gmra.mxu0 %v770
  %v913 = vpop.f32.mrf.mxu0
  %v914 = vadd.f32 %v792, %v913
  %v915 = vpop.f32.mrf.mxu0
  %v916 = vadd.f32 %v796, %v915
  %v917 = vpop.f32.mrf.mxu0
  %v918 = vpop.f32.mrf.mxu0
  %919 = vdwg.mxu0
  %v920 = vxor.u32 %v914, 2147483648
  %v921 = vxor.u32 %v916, 2147483648
  %v922 = vmul.f32 %v920, 1.442695
  %v923 = vpow.pop %v922
  %v924 = vmul.f32 %v921, 1.442695
  %v925 = vpow.pop %v924
  %v926 = vadd.f32 %v923, 1.0
  %v927 = vadd.f32 %v925, 1.0
  %v928 = vrcp.pop %v926
  %v929 = vmul.f32 1.0, %v928
  %v930 = vrcp.pop %v927
  %v931 = vmul.f32 1.0, %v930
  %932 = vst [vmem:[%s18] sm:$0xff] %v929
  %933 = vst [vmem:[%s18 + $0x8] sm:$0xff] %v931
  %934 = vst [vmem:[%s19] sm:$0xff] %v518
  // Predicated region
  $region74: #{linear_vae_forward.1} parent=0 // pred_check
    _
  $region75: #{linear_vae_forward.1} parent=0 // pred_check_branch
    %936 = sbr.rel (0) target = $region77
  $region76: #{linear_vae_forward.1} parent=0 // pred_region
    _
  $region77: #{linear_vae_forward.1} parent=0 // pred_fallthru
    _
  // Predicated region
  $region78: #{linear_vae_forward.1} parent=0 // pred_check
    _
  $region79: #{linear_vae_forward.1} parent=0 // pred_check_branch
    %938 = sbr.rel (0) target = $region81
  $region80: #{linear_vae_forward.1} parent=0 // pred_region
    _
  $region81: #{linear_vae_forward.1} parent=0 // pred_fallthru
    _
  // Predicated region
  $region82: #{linear_vae_forward.1} parent=0 // pred_check
    _
  $region83: #{linear_vae_forward.1} parent=0 // pred_check_branch
    %940 = sbr.rel (0) target = $region85
  $region84: #{linear_vae_forward.1} parent=0 // pred_region
    _
  $region85: #{linear_vae_forward.1} parent=0 // pred_fallthru
    _
  // Predicated region
  $region86: #{linear_vae_forward.1} parent=0 // pred_check
    _
  $region87: #{linear_vae_forward.1} parent=0 // pred_check_branch
    %942 = sbr.rel (0) target = $region89
  $region88: #{linear_vae_forward.1} parent=0 // pred_region
    _
  $region89: #{linear_vae_forward.1} parent=0 // pred_fallthru
    _

</llo_original>
